<compile_context>
chip_gen: v7x
topology: tpu7x:2x2x1
jax: 0.10.0
libtpu: 0.0.40
codegen_flags: <defaults>
</compile_context>

<pallas_src>
import math

import jax
import jax.numpy as jnp
from jax import lax
from jax.experimental import pallas as pl
from jax.experimental.pallas import tpu as pltpu


def _round_up(x, m):
    return ((x + m - 1) // m) * m


def _choose_seq_tile(length, pref):
    """Pad length to a multiple of 128 and pick a 128/`pref` tile dividing it."""
    l128 = _round_up(max(int(length), 1), 128)
    tile = pref if (l128 % pref == 0) else 128
    return tile, l128


# ---------------------------------------------------------------------------
# Tiled linear projection kernel: y = x @ Wt + b  (bf16 MXU, f32 accumulate)
# ---------------------------------------------------------------------------
def _linear_kernel(x_ref, w_ref, b_ref, o_ref):
    x = x_ref[...].astype(jnp.bfloat16)
    acc = jnp.dot(x, w_ref[...], preferred_element_type=jnp.float32)
    o_ref[...] = (acc + b_ref[...]).astype(o_ref.dtype)


def linear(x2d, wt, b_row, *, out_dtype=jnp.bfloat16, tile_m=512, tile_n=512):
    """x2d: (M, Din); wt: (Din, Dout) bf16; b_row: (1, Dout) f32."""
    M, Din = x2d.shape
    Dout = wt.shape[1]
    x_bytes = x2d.dtype.itemsize
    o_bytes = jnp.dtype(out_dtype).itemsize

    # Output-column (lane) tile: full Dout unless it is a large multiple of 128.
    if Dout % 128 == 0 and Dout > tile_n:
        tn = next(t for t in (tile_n, 384, 256, 128) if Dout % t == 0)
    else:
        tn = Dout

    # Row tile: as large as possible under a VMEM budget; pad M instead of
    # collapsing the pipeline to one giant step.
    # TODO(synk): for very large Din, add a Din reduction grid axis with an f32
    # VMEM accumulator instead of keeping the full (Din, tn) weight slab resident.
    def _need(tm_):
        return 2 * (tm_ * Din * x_bytes + Din * tn * wt.dtype.itemsize
                    + tn * 4 + tm_ * tn * o_bytes)

    tm = tile_m
    while tm > 64 and _need(tm) > (40 << 20):
        tm //= 2
    if M < tm:
        tm = _round_up(M, 8)
    M_pad = _round_up(M, tm)
    if M_pad != M:
        x2d = jnp.pad(x2d, ((0, M_pad - M), (0, 0)))

    vmem_limit = int(min(max(_need(tm) + (8 << 20), 32 << 20), 60 << 20))

    y = pl.pallas_call(
        _linear_kernel,
        out_shape=jax.ShapeDtypeStruct((M_pad, Dout), out_dtype),
        grid=(M_pad // tm, Dout // tn),
        in_specs=[
            pl.BlockSpec((tm, Din), lambda i, j: (i, 0)),     # streamed rows
            pl.BlockSpec((Din, tn), lambda i, j: (0, j)),     # weight column tile
            pl.BlockSpec((1, tn), lambda i, j: (0, j)),       # bias column tile
        ],
        out_specs=pl.BlockSpec((tm, tn), lambda i, j: (i, j)),
        compiler_params=pltpu.CompilerParams(
            dimension_semantics=("parallel", "parallel"),
            vmem_limit_bytes=vmem_limit),
    )(x2d, wt, b_row)
    return y if M_pad == M else y[:M]


# ---------------------------------------------------------------------------
# Attention core: one (batch, head, q-tile) per parallel grid point, flash
# online softmax over the innermost ("arbitrary") kv axis.
# ---------------------------------------------------------------------------
def _attn_core_kernel(q_ref, k_ref, v_ref, bias_ref, o_ref, m_sc, l_sc, acc_sc):
    ki = pl.program_id(3)

    @pl.when(ki == 0)
    def _init():
        m_sc[...] = jnp.full(m_sc.shape, -jnp.inf, dtype=m_sc.dtype)
        l_sc[...] = jnp.zeros(l_sc.shape, dtype=l_sc.dtype)
        acc_sc[...] = jnp.zeros(acc_sc.shape, dtype=acc_sc.dtype)

    q = q_ref[...]                        # (tq, cqk_pad) bf16, scale pre-folded
    k = k_ref[...]                        # (tk, cqk_pad) bf16
    bias = bias_ref[...]                  # (1, tk) f32 additive mask: 0 / -1e30

    # q @ k^T via contraction of the last dims (no explicit transpose), f32 acc.
    s = lax.dot_general(q, k, (((1,), (1,)), ((), ())),
                        preferred_element_type=jnp.float32)       # (tq, tk)
    s = s + bias

    m_prev = m_sc[...]                                            # (tq, 1)
    m_new = jnp.maximum(m_prev, jnp.max(s, axis=-1, keepdims=True))
    alpha = jnp.exp(m_prev - m_new)                               # f32 (tq, 1)
    # bf16 exp -> EUP fast path on v6e/v7x; row-sum kept in f32.
    p = jnp.exp((s - m_new).astype(jnp.bfloat16))                 # (tq, tk) bf16
    l_sc[...] = alpha * l_sc[...] + jnp.sum(p.astype(jnp.float32),
                                            axis=-1, keepdims=True)
    acc_sc[...] = alpha * acc_sc[...] + jnp.dot(
        p, v_ref[...], preferred_element_type=jnp.float32)        # (tq, cv_pad)
    m_sc[...] = m_new

    @pl.when(ki == pl.num_programs(3) - 1)
    def _finalize():
        inv = pl.reciprocal(l_sc[...], approx=True)
        o_ref[...] = (acc_sc[...] * inv).astype(o_ref.dtype)      # lane-dense store


def attention_core(qp, kp, vp, bias, *, num_heads, cqk, cv, tq, tk):
    """qp: (N, Lq_pad, H*cqk), kp/vp: (N, Lkv_pad, H*cqk / H*cv), bias: (N,1,Lkv_pad).
    cqk / cv here are the per-head dims already padded to multiples of 128."""
    N, Lq_pad, _ = qp.shape
    Lkv_pad = kp.shape[1]

    blk = 2 * (tq * cqk * 2 + tk * cqk * 2 + tk * cv * 2 + tk * 4 + tq * cv * 2)
    scr = tq * cv * 4 + 2 * tq * 128 * 4
    vmem_limit = int(min(max(blk + scr + (8 << 20), 32 << 20), 60 << 20))

    return pl.pallas_call(
        _attn_core_kernel,
        out_shape=jax.ShapeDtypeStruct((N, Lq_pad, num_heads * cv), jnp.bfloat16),
        grid=(N, num_heads, Lq_pad // tq, Lkv_pad // tk),
        in_specs=[
            pl.BlockSpec((None, tq, cqk), lambda n, h, qi, ki: (n, qi, h)),
            pl.BlockSpec((None, tk, cqk), lambda n, h, qi, ki: (n, ki, h)),
            pl.BlockSpec((None, tk, cv), lambda n, h, qi, ki: (n, ki, h)),
            pl.BlockSpec((None, 1, tk), lambda n, h, qi, ki: (n, 0, ki)),
        ],
        out_specs=pl.BlockSpec((None, tq, cv), lambda n, h, qi, ki: (n, qi, h)),
        scratch_shapes=[
            pltpu.VMEM((tq, 1), jnp.float32),    # running max
            pltpu.VMEM((tq, 1), jnp.float32),    # running sum
            pltpu.VMEM((tq, cv), jnp.float32),   # running output
        ],
        compiler_params=pltpu.CompilerParams(
            dimension_semantics=("parallel", "parallel", "parallel", "arbitrary"),
            vmem_limit_bytes=vmem_limit),
    )(qp, kp, vp, bias)


# ---------------------------------------------------------------------------
# Module wrapper (parameter setup + glue in plain JAX)
# ---------------------------------------------------------------------------
class AttentionPallas:
    def __init__(self, q_in_dim, k_in_dim, v_in_dim, qk_proj_dim, v_proj_dim,
                 num_heads, out_dim, return_all_features=False, add_mask=False,
                 key=None):
        assert qk_proj_dim % num_heads == 0 and v_proj_dim % num_heads == 0
        self.num_heads = num_heads
        self.return_all_features = return_all_features
        self.add_mask = add_mask
        self.cqk = qk_proj_dim // num_heads
        self.cv = v_proj_dim // num_heads
        # Per-head dims padded to a multiple of 128 so head slices in the
        # attention kernel are lane-aligned (zero padding keeps the math exact).
        self.cqk_pad = _round_up(self.cqk, 128)
        self.cv_pad = _round_up(self.cv, 128)

        if key is None:
            key = jax.random.PRNGKey(0)
        k1, k2, k3, k4 = jax.random.split(key, 4)

        def xavier(rng, out_d, in_d):
            bound = math.sqrt(6.0 / (in_d + out_d))
            return jax.random.uniform(rng, (out_d, in_d), jnp.float32, -bound, bound)

        # Master weights in torch (Dout, Din) layout, f32 — used by the reference.
        self.q_w = xavier(k1, qk_proj_dim, q_in_dim)
        self.q_b = jnp.zeros((qk_proj_dim,), jnp.float32)
        self.k_w = xavier(k2, qk_proj_dim, k_in_dim)
        self.k_b = jnp.zeros((qk_proj_dim,), jnp.float32)
        self.v_w = xavier(k3, v_proj_dim, v_in_dim)
        self.v_b = jnp.zeros((v_proj_dim,), jnp.float32)
        self.o_w = xavier(k4, out_dim, v_proj_dim)
        self.o_b = jnp.zeros((out_dim,), jnp.float32)

        H = num_heads
        scale = 1.0 / math.sqrt(self.cqk)

        def pad_cols(wt, c, c_pad):          # (Din, H*c) -> (Din, H*c_pad)
            if c_pad == c:
                return wt
            d = wt.shape[0]
            w3 = wt.reshape(d, H, c)
            return jnp.pad(w3, ((0, 0), (0, 0), (0, c_pad - c))).reshape(d, H * c_pad)

        def pad_vec(b, c, c_pad):            # (H*c,) -> (H*c_pad,)
            if c_pad == c:
                return b
            return jnp.pad(b.reshape(H, c), ((0, 0), (0, c_pad - c))).reshape(H * c_pad)

        def pad_rows(wt, c, c_pad):          # (H*c, Dout) -> (H*c_pad, Dout)
            if c_pad == c:
                return wt
            d = wt.shape[1]
            w3 = wt.reshape(H, c, d)
            return jnp.pad(w3, ((0, 0), (0, c_pad - c), (0, 0))).reshape(H * c_pad, d)

        # Pallas-ready weights: transposed once to (Din, Dout), bf16 for the MXU,
        # 1/sqrt(Cqk) folded into the q projection, head dims zero-padded to 128.
        self._q_wt = pad_cols(self.q_w.T * scale, self.cqk, self.cqk_pad).astype(jnp.bfloat16)
        self._q_b2 = pad_vec(self.q_b * scale, self.cqk, self.cqk_pad).reshape(1, -1).astype(jnp.float32)
        self._k_wt = pad_cols(self.k_w.T, self.cqk, self.cqk_pad).astype(jnp.bfloat16)
        self._k_b2 = pad_vec(self.k_b, self.cqk, self.cqk_pad).reshape(1, -1).astype(jnp.float32)
        self._v_wt = pad_cols(self.v_w.T, self.cv, self.cv_pad).astype(jnp.bfloat16)
        self._v_b2 = pad_vec(self.v_b, self.cv, self.cv_pad).reshape(1, -1).astype(jnp.float32)
        self._o_wt = pad_rows(self.o_w.T, self.cv, self.cv_pad).astype(jnp.bfloat16)
        self._o_b2 = self.o_b.reshape(1, -1).astype(jnp.float32)

        # Per-generation tile preferences: v6e/v7x want tk=256; v5e prefers tk=128.
        try:
            kind = jax.devices()[0].device_kind.lower()
        except Exception:
            kind = ""
        is_v5e = ("v5 lite" in kind) or ("v5e" in kind) or ("v5litepod" in kind)
        self._pref_tq = 256
        self._pref_tk = 128 if is_v5e else 256

    def __call__(self, q, k, v, mask):
        if not self.add_mask:
            mask = jnp.ones_like(mask)
        assert q.ndim == 3 and k.ndim == 3 and v.ndim == 3
        N, Lq, _ = q.shape
        Lkv = k.shape[1]
        assert k.shape[0] == N and v.shape[0] == N and v.shape[1] == Lkv
        H = self.num_heads

        # Pad sequence lengths to multiples of 128 so all tiles are >=128-wide.
        tq, Lq_pad = _choose_seq_tile(Lq, self._pref_tq)
        tk, Lkv_pad = _choose_seq_tile(Lkv, self._pref_tk)
        if Lq_pad != Lq:
            q = jnp.pad(q, ((0, 0), (0, Lq_pad - Lq), (0, 0)))
        mask_p = mask
        if Lkv_pad != Lkv:
            k = jnp.pad(k, ((0, 0), (0, Lkv_pad - Lkv), (0, 0)))
            v = jnp.pad(v, ((0, 0), (0, Lkv_pad - Lkv), (0, 0)))
            mask_p = jnp.pad(mask, ((0, 0), (0, Lkv_pad - Lkv)))  # zeros => masked

        # Projections (tiled, pipelined pallas_calls; bf16 activations out).
        qp = linear(q.reshape(N * Lq_pad, -1), self._q_wt, self._q_b2).reshape(N, Lq_pad, -1)
        kp = linear(k.reshape(N * Lkv_pad, -1), self._k_wt, self._k_b2).reshape(N, Lkv_pad, -1)
        vp = linear(v.reshape(N * Lkv_pad, -1), self._v_wt, self._v_b2).reshape(N, Lkv_pad, -1)

        # Additive mask (0 keep / -1e30 drop): no -inf NaN hazard; padded kv
        # positions are dropped the same way.
        bias = jnp.where(mask_p != 0, 0.0, -1e30).astype(jnp.float32).reshape(N, 1, Lkv_pad)

        mix = attention_core(qp, kp, vp, bias, num_heads=H,
                             cqk=self.cqk_pad, cv=self.cv_pad, tq=tq, tk=tk)

        out = linear(mix.reshape(N * Lq_pad, -1), self._o_wt, self._o_b2,
                     out_dtype=jnp.float32).reshape(N, Lq_pad, -1)
        out = out[:, :Lq, :]

        if self.return_all_features:
            # The flash kernel never materializes aff; when asked explicitly we
            # compute it (plain JAX) from the Pallas projections (crop padding,
            # undo the folded 1/sqrt(Cqk) on q).
            sc = math.sqrt(self.cqk)
            qh = qp[:, :Lq].astype(jnp.float32).reshape(N, Lq, H, self.cqk_pad)[..., :self.cqk] * sc
            kh = kp[:, :Lkv].astype(jnp.float32).reshape(N, Lkv, H, self.cqk_pad)[..., :self.cqk]
            vh = vp[:, :Lkv].astype(jnp.float32).reshape(N, Lkv, H, self.cv_pad)[..., :self.cv]
            aff = jnp.einsum('nqhc,nkhc->nqkh', qh / sc, kh)
            keep = (mask != 0)[:, None, :, None]
            aff = jnp.where(keep, aff, -jnp.inf)
            aff = jax.nn.softmax(aff, axis=-2)
            return dict(q=qh, k=kh, v=vh, aff=aff, out=out)
        return out


# ---------------------------------------------------------------------------
# Pure-JAX reference (mirrors the torch forward) for validation.
# ---------------------------------------------------------------------------
def reference_forward(mod, q, k, v, mask):
    if not mod.add_mask:
        mask = jnp.ones_like(mask)
    N, Lq, _ = q.shape
    Lkv = k.shape[1]
    H = mod.num_heads
    qp = q @ mod.q_w.T + mod.q_b
    kp = k @ mod.k_w.T + mod.k_b
    vp = v @ mod.v_w.T + mod.v_b
    Cqk = qp.shape[-1] // H
    Cv = vp.shape[-1] // H
    qh = qp.reshape(N, Lq, H, Cqk)
    kh = kp.reshape(N, Lkv, H, Cqk)
    vh = vp.reshape(N, Lkv, H, Cv)
    aff = jnp.einsum('nqhc,nkhc->nqkh', qh / math.sqrt(Cqk), kh)
    keep = (mask != 0)[:, None, :, None]
    aff = jnp.where(keep, aff, -jnp.inf)
    aff = jax.nn.softmax(aff, axis=-2)
    mix = jnp.einsum('nqlh,nlhc->nqhc', aff, vh)
    return mix.reshape(N, Lq, H * Cv) @ mod.o_w.T + mod.o_b


if __name__ == "__main__":
    key = jax.random.PRNGKey(0)
    kq, kk, kv, km, kp = jax.random.split(key, 5)

    N, Lq, Lkv = 2, 8, 8
    q_in = k_in = v_in = 32
    qk_proj = v_proj = 32
    H = 4
    out_dim = 32

    q = jax.random.normal(kq, (N, Lq, q_in), jnp.float32)
    k = jax.random.normal(kk, (N, Lkv, k_in), jnp.float32)
    v = jax.random.normal(kv, (N, Lkv, v_in), jnp.float32)
    # binary mask over kv positions (at least one valid per row)
    mask = (jax.random.uniform(km, (N, Lkv)) > 0.3).astype(jnp.float32)
    mask = mask.at[:, 0].set(1.0)

    mod = AttentionPallas(q_in, k_in, v_in, qk_proj, v_proj, H, out_dim,
                          add_mask=True, key=kp)

    out = mod(q, k, v, mask)
    out = jax.block_until_ready(out)

    ref = reference_forward(mod, q, k, v, mask)
    assert out.shape == (N, Lq, out_dim)
    # bf16 MXU operands / bf16 softmax exp (f32 accumulation & stats) -> small
    # rounding vs the pure-f32 reference; tolerance sized accordingly.
    assert jnp.allclose(out, ref, atol=5e-2, rtol=5e-2), "mismatch vs reference"

    print("KERNEL_OK")
</pallas_src>

<mosaic_0001>
module attributes {stable_mosaic.version = 11 : i64} {
  func.func @_linear_kernel(%arg0: i32, %arg1: i32, %arg2: memref<256x32xf32, #tpu.memory_space<vmem>>, %arg3: memref<32x512xbf16, #tpu.memory_space<vmem>>, %arg4: memref<1x512xf32, #tpu.memory_space<vmem>>, %arg5: memref<256x512xbf16, #tpu.memory_space<vmem>>) attributes {dimension_semantics = [#tpu.dimension_semantics<parallel>, #tpu.dimension_semantics<parallel>], iteration_bounds = array<i64: 1, 1>, scalar_prefetch = 0 : i64, scratch_operands = 0 : i64, tpu.core_type = #tpu.core_type<tc>, window_params = [{transform_indices = @transform_0, window_bounds = array<i64: 256, 32>}, {transform_indices = @transform_1, window_bounds = array<i64: 32, 512>}, {transform_indices = @transform_2, window_bounds = array<i64: 1, 512>}, {transform_indices = @transform_3, window_bounds = array<i64: 256, 512>}]} {
    %c0 = arith.constant 0 : index
    %c0_0 = arith.constant 0 : index
    %0 = vector.load %arg2[%c0, %c0_0] : memref<256x32xf32, #tpu.memory_space<vmem>>, vector<256x32xf32>
    %1 = arith.truncf %0 : vector<256x32xf32> to vector<256x32xbf16>
    %c0_1 = arith.constant 0 : index
    %c0_2 = arith.constant 0 : index
    %2 = vector.load %arg3[%c0_1, %c0_2] : memref<32x512xbf16, #tpu.memory_space<vmem>>, vector<32x512xbf16>
    %cst = arith.constant dense<0.000000e+00> : vector<256x512xf32>
    %3 = tpu.matmul %1, %2, %cst {dimension_numbers = #tpu.dot_dimension_numbers<[1], [0], [0], [1], [0, 0, 1, 1], [], []>} : vector<256x32xbf16>, vector<32x512xbf16>, vector<256x512xf32> -> vector<256x512xf32>
    %c0_3 = arith.constant 0 : index
    %c0_4 = arith.constant 0 : index
    %4 = vector.load %arg4[%c0_3, %c0_4] : memref<1x512xf32, #tpu.memory_space<vmem>>, vector<1x512xf32>
    %5 = vector.broadcast %4 : vector<1x512xf32> to vector<256x512xf32>
    %6 = arith.addf %3, %5 : vector<256x512xf32>
    %7 = arith.truncf %6 : vector<256x512xf32> to vector<256x512xbf16>
    %c0_5 = arith.constant 0 : index
    %c0_6 = arith.constant 0 : index
    %8 = vector.load %arg5[%c0_5, %c0_6] : memref<256x512xbf16, #tpu.memory_space<vmem>>, vector<256x512xbf16>
    tpu.vector_store %arg5[%c0_5, %c0_6], %7 {strides = array<i32>} : memref<256x512xbf16, #tpu.memory_space<vmem>>, vector<256x512xbf16>,
    return
  }
  func.func @transform_0(%arg0: i32, %arg1: i32) -> (i32, i32) {
    %c0_i32 = arith.constant 0 : i32
    %c0_i32_0 = arith.constant 0 : i32
    return %arg0, %c0_i32 : i32, i32
  }
  func.func @transform_1(%arg0: i32, %arg1: i32) -> (i32, i32) {
    %c0_i32 = arith.constant 0 : i32
    %c0_i32_0 = arith.constant 0 : i32
    return %c0_i32, %arg1 : i32, i32
  }
  func.func @transform_2(%arg0: i32, %arg1: i32) -> (i32, i32) {
    %c0_i32 = arith.constant 0 : i32
    %c0_i32_0 = arith.constant 0 : i32
    return %c0_i32, %arg1 : i32, i32
  }
  func.func @transform_3(%arg0: i32, %arg1: i32) -> (i32, i32) {
    %c0_i32 = arith.constant 0 : i32
    return %arg0, %arg1 : i32, i32
  }
}

</mosaic_0001>

<llo_original>
// kernel: tpu_custom_call.1
$region0: #{tpu_custom_call.1}
  #allocation0 [shape = 'u32[]', space=smem, size = 0x4, offset = 0x4, fixed_abs, tag = 'smem constant byte address 0x4 - core index']
  #allocation1 [shape = 'u32[144,128]{1,0:T(1,128)}', space=vmem, size = 0x12000, scoped, tag = 'internal scratch']
  %s0 = inlined_call_operand.vmem [shape: f32[256,32], index: 0, kind: input, shape index: {}]
  %s1 = inlined_call_operand.vmem [shape: bf16[32,512], index: 1, kind: input, shape index: {}]
  %s2 = inlined_call_operand.vmem [shape: f32[1,512], index: 2, kind: input, shape index: {}]
  %s3 = inlined_call_operand.hbm [shape: bf16[256,512], index: 3, kind: output, shape index: {}]
  %s4 = sld [smem:[#allocation0]]
  $region22: #{tpu_custom_call.1} parent=0
    _
  %s6 = ssub.s32 1, %s4
  %s7 = scalar_select 0, %s6, %s4
  $region1: #{tpu_custom_call.1} parent=0
    #allocation2 [shape = 'u8[262144]{0}', space=vmem, size = 0x40000, scoped, tag = 'output window, operand 0, single buffered']
    #allocation3 [shape = 's32[1]{0}', space=sflag, size = 0x4, scoped, tag = 'scoped memory for tpu_custom_call.1']
    %8 = vsyncpa [#allocation3], 0
    // Predicated region
    $region2: #{tpu_custom_call.1} parent=1 // pred_check
      _
    $region3: #{tpu_custom_call.1} parent=1 // pred_check_branch
      %10 = sbr.rel (0) target = $region5
    $region4: #{tpu_custom_call.1} parent=1 // pred_region
      _
    $region5: #{tpu_custom_call.1} parent=1 // pred_fallthru
      _
    // Predicated region
    $region6: #{tpu_custom_call.1} parent=1 // pred_check
      _
    $region7: #{tpu_custom_call.1} parent=1 // pred_check_branch
      %12 = sbr.rel (0) target = $region9
    $region8: #{tpu_custom_call.1} parent=1 // pred_region
      _
    $region9: #{tpu_custom_call.1} parent=1 // pred_fallthru
      _
    // Predicated region
    $region10: #{tpu_custom_call.1} parent=1 // pred_check
      _
    $region11: #{tpu_custom_call.1} parent=1 // pred_check_branch
      %14 = sbr.rel (0) target = $region13
    $region12: #{tpu_custom_call.1} parent=1 // pred_region
      _
    $region13: #{tpu_custom_call.1} parent=1 // pred_fallthru
      _
    %v16 = vld [vmem:[%s0] sm:$0xff]
    %v17 = vld [vmem:[%s0 + $0x8] sm:$0xff]
    %v18 = vld [vmem:[%s0 + $0x10] sm:$0xff]
    %v19 = vld [vmem:[%s0 + $0x18] sm:$0xff]
    %v20 = vld [vmem:[%s0 + $0x20] sm:$0xff]
    %v21 = vld [vmem:[%s0 + $0x28] sm:$0xff]
    %v22 = vld [vmem:[%s0 + $0x30] sm:$0xff]
    %v23 = vld [vmem:[%s0 + $0x38] sm:$0xff]
    %v24 = vld [vmem:[%s0 + $0x40] sm:$0xff]
    %v25 = vld [vmem:[%s0 + $0x48] sm:$0xff]
    %v26 = vld [vmem:[%s0 + $0x50] sm:$0xff]
    %v27 = vld [vmem:[%s0 + $0x58] sm:$0xff]
    %v28 = vld [vmem:[%s0 + $0x60] sm:$0xff]
    %v29 = vld [vmem:[%s0 + $0x68] sm:$0xff]
    %v30 = vld [vmem:[%s0 + $0x70] sm:$0xff]
    %v31 = vld [vmem:[%s0 + $0x78] sm:$0xff]
    %v32 = vld [vmem:[%s0 + $0x80] sm:$0xff]
    %v33 = vld [vmem:[%s0 + $0x88] sm:$0xff]
    %v34 = vld [vmem:[%s0 + $0x90] sm:$0xff]
    %v35 = vld [vmem:[%s0 + $0x98] sm:$0xff]
    %v36 = vld [vmem:[%s0 + $0xa0] sm:$0xff]
    %v37 = vld [vmem:[%s0 + $0xa8] sm:$0xff]
    %v38 = vld [vmem:[%s0 + $0xb0] sm:$0xff]
    %v39 = vld [vmem:[%s0 + $0xb8] sm:$0xff]
    %v40 = vld [vmem:[%s0 + $0xc0] sm:$0xff]
    %v41 = vld [vmem:[%s0 + $0xc8] sm:$0xff]
    %v42 = vld [vmem:[%s0 + $0xd0] sm:$0xff]
    %v43 = vld [vmem:[%s0 + $0xd8] sm:$0xff]
    %v44 = vld [vmem:[%s0 + $0xe0] sm:$0xff]
    %v45 = vld [vmem:[%s0 + $0xe8] sm:$0xff]
    %v46 = vld [vmem:[%s0 + $0xf0] sm:$0xff]
    %v47 = vld [vmem:[%s0 + $0xf8] sm:$0xff]
    %v48 = vpack.c.bf16 %v17, %v16
    %v49 = vpack.c.bf16 %v19, %v18
    %v50 = vpack.c.bf16 %v21, %v20
    %v51 = vpack.c.bf16 %v23, %v22
    %v52 = vpack.c.bf16 %v25, %v24
    %v53 = vpack.c.bf16 %v27, %v26
    %v54 = vpack.c.bf16 %v29, %v28
    %v55 = vpack.c.bf16 %v31, %v30
    %v56 = vpack.c.bf16 %v33, %v32
    %v57 = vpack.c.bf16 %v35, %v34
    %v58 = vpack.c.bf16 %v37, %v36
    %v59 = vpack.c.bf16 %v39, %v38
    %v60 = vpack.c.bf16 %v41, %v40
    %v61 = vpack.c.bf16 %v43, %v42
    %v62 = vpack.c.bf16 %v45, %v44
    %v63 = vpack.c.bf16 %v47, %v46
    %v64 = vld [vmem:[%s1] sm:$0xff]
    %v65 = vld [vmem:[%s1 + $0x8] sm:$0xff]
    %v66 = vld [vmem:[%s1 + $0x10] sm:$0xff]
    %v67 = vld [vmem:[%s1 + $0x18] sm:$0xff]
    %v68 = vld [vmem:[%s1 + $0x20] sm:$0xff]
    %v69 = vld [vmem:[%s1 + $0x28] sm:$0xff]
    %v70 = vld [vmem:[%s1 + $0x30] sm:$0xff]
    %v71 = vld [vmem:[%s1 + $0x38] sm:$0xff]
    %v72 = vld [vmem:[%s2] sm:$0xf]
    %v74 = vlaneseq
    %v75 = vshrl.u32 %v74, 7
    %v76 = vsub.s32 0, %v75
    %v77 = vrot.slane %v72, %v76
    %v78 = vlaneseq
    %v79 = vshrl.u32 %v78, 7
    %v80 = vsub.s32 1, %v79
    %v81 = vrot.slane %v72, %v80
    %v82 = vlaneseq
    %v83 = vshrl.u32 %v82, 7
    %v84 = vsub.s32 2, %v83
    %v85 = vrot.slane %v72, %v84
    %v86 = vlaneseq
    %v87 = vshrl.u32 %v86, 7
    %v88 = vsub.s32 3, %v87
    %v89 = vrot.slane %v72, %v88
    %v102 = vunpack.c.l.b16 %v64
    %v103 = vunpack.c.h.b16 %v64
    %v104 = vunpack.c.l.b16 %v65
    %v105 = vunpack.c.h.b16 %v65
    %v106 = vunpack.c.l.b16 %v66
    %v107 = vunpack.c.h.b16 %v66
    %v108 = vunpack.c.l.b16 %v67
    %v109 = vunpack.c.h.b16 %v67
    %v110 = vunpack.c.l.b16 %v68
    %v111 = vunpack.c.h.b16 %v68
    %v112 = vunpack.c.l.b16 %v69
    %v113 = vunpack.c.h.b16 %v69
    %v114 = vunpack.c.l.b16 %v70
    %v115 = vunpack.c.h.b16 %v70
    %v116 = vunpack.c.l.b16 %v71
    %v117 = vunpack.c.h.b16 %v71
    %v118 = vpack.c.b16 %v106, %v102
    %v119 = vpack.c.b16 %v107, %v103
    %v120 = vpack.c.b16 %v108, %v104
    %v121 = vpack.c.b16 %v109, %v105
    %v122 = vpack.c.b16 %v114, %v110
    %v123 = vpack.c.b16 %v115, %v111
    %v124 = vpack.c.b16 %v116, %v112
    %v125 = vpack.c.b16 %v117, %v113
    %vm134 = vcmask 261120
    %v136 = vsel %vm134, %v48, 0
    %v139 = vsel %vm134, %v49, 0
    %v142 = vsel %vm134, %v50, 0
    %v145 = vsel %vm134, %v51, 0
    %v148 = vsel %vm134, %v52, 0
    %v151 = vsel %vm134, %v53, 0
    %v154 = vsel %vm134, %v54, 0
    %v157 = vsel %vm134, %v55, 0
    %v160 = vsel %vm134, %v56, 0
    %v163 = vsel %vm134, %v57, 0
    %v166 = vsel %vm134, %v58, 0
    %v169 = vsel %vm134, %v59, 0
    %v172 = vsel %vm134, %v60, 0
    %v175 = vsel %vm134, %v61, 0
    %v178 = vsel %vm134, %v62, 0
    %v181 = vsel %vm134, %v63, 0
    %183 = vmatprep.subr.bf16.mxu0 %v119
    %184 = vmatpush1.bf16.msra.mxu0 %v118
    %185 = vmatprep.subr.bf16.mxu0 %v123
    %186 = vmatpush1.bf16.msra.mxu0 %v122
    %187 = vmatprep.subr.bf16.mxu0 0
    %188 = vmatpush1.bf16.msra.mxu0 0
    %189 = vmatprep.subr.bf16.mxu0 0
    %190 = vmatpush1.bf16.msra.mxu0 0
    %191 = vmatprep.subr.bf16.mxu0 0
    %192 = vmatpush1.bf16.msra.mxu0 0
    %193 = vmatprep.subr.bf16.mxu0 0
    %194 = vmatpush1.bf16.msra.mxu0 0
    %195 = vmatprep.subr.bf16.mxu0 0
    %196 = vmatpush1.bf16.msra.mxu0 0
    %197 = vmatprep.subr.bf16.mxu0 0
    %198 = vmatpush1.bf16.msra.mxu0 0
    %199 = vmatprep.subr.bf16.mxu0 0
    %200 = vmatpush1.bf16.msra.mxu0 0
    %201 = vmatprep.subr.bf16.mxu0 0
    %202 = vmatpush1.bf16.msra.mxu0 0
    %203 = vmatprep.subr.bf16.mxu0 0
    %204 = vmatpush1.bf16.msra.mxu0 0
    %205 = vmatprep.subr.bf16.mxu0 0
    %206 = vmatpush1.bf16.msra.mxu0 0
    %207 = vmatprep.subr.bf16.mxu0 0
    %208 = vmatpush1.bf16.msra.mxu0 0
    %209 = vmatprep.subr.bf16.mxu0 0
    %210 = vmatpush1.bf16.msra.mxu0 0
    %211 = vmatprep.subr.bf16.mxu0 0
    %212 = vmatpush1.bf16.msra.mxu0 0
    %213 = vmatprep.subr.bf16.mxu0 0
    %214 = vmatpush1.bf16.msra.mxu0 0
    %215 = vmatprep.mubr.bf16.mxu0 0
    %216 = vmatmul.mubr.bf16.gmra.mrb[0].mxu0 %v136
    %v217 = vpop.f32.mrb[0].mxu0
    %v218 = vadd.f32 %v77, %v217
    %v219 = vpop.f32.mrb[0].mxu0
    %v220 = vadd.f32 %v81, %v219
    %v221 = vpop.f32.mrb[0].mxu0
    %v222 = vadd.f32 %v77, %v221
    %v223 = vpop.f32.mrb[0].mxu0
    %v224 = vadd.f32 %v81, %v223
    %225 = vmatprep.mubr.bf16.mxu0 0
    %226 = vmatmul.mubr.bf16.gmra.mrb[0].mxu0 %v139
    %v227 = vpop.f32.mrb[0].mxu0
    %v228 = vadd.f32 %v77, %v227
    %v229 = vpop.f32.mrb[0].mxu0
    %v230 = vadd.f32 %v81, %v229
    %v231 = vpop.f32.mrb[0].mxu0
    %v232 = vadd.f32 %v77, %v231
    %v233 = vpop.f32.mrb[0].mxu0
    %v234 = vadd.f32 %v81, %v233
    %235 = vmatprep.mubr.bf16.mxu0 0
    %236 = vmatmul.mubr.bf16.gmra.mrb[0].mxu0 %v142
    %v237 = vpop.f32.mrb[0].mxu0
    %v238 = vadd.f32 %v77, %v237
    %v239 = vpop.f32.mrb[0].mxu0
    %v240 = vadd.f32 %v81, %v239
    %v241 = vpop.f32.mrb[0].mxu0
    %v242 = vadd.f32 %v77, %v241
    %v243 = vpop.f32.mrb[0].mxu0
    %v244 = vadd.f32 %v81, %v243
    %245 = vmatprep.mubr.bf16.mxu0 0
    %246 = vmatmul.mubr.bf16.gmra.mrb[0].mxu0 %v145
    %v247 = vpop.f32.mrb[0].mxu0
    %v248 = vadd.f32 %v77, %v247
    %v249 = vpop.f32.mrb[0].mxu0
    %v250 = vadd.f32 %v81, %v249
    %v251 = vpop.f32.mrb[0].mxu0
    %v252 = vadd.f32 %v77, %v251
    %v253 = vpop.f32.mrb[0].mxu0
    %v254 = vadd.f32 %v81, %v253
    %255 = vmatprep.mubr.bf16.mxu0 0
    %256 = vmatmul.mubr.bf16.gmra.mrb[0].mxu0 %v148
    %v257 = vpop.f32.mrb[0].mxu0
    %v258 = vadd.f32 %v77, %v257
    %v259 = vpop.f32.mrb[0].mxu0
    %v260 = vadd.f32 %v81, %v259
    %v261 = vpop.f32.mrb[0].mxu0
    %v262 = vadd.f32 %v77, %v261
    %v263 = vpop.f32.mrb[0].mxu0
    %v264 = vadd.f32 %v81, %v263
    %265 = vmatprep.mubr.bf16.mxu0 0
    %266 = vmatmul.mubr.bf16.gmra.mrb[0].mxu0 %v151
    %v267 = vpop.f32.mrb[0].mxu0
    %v268 = vadd.f32 %v77, %v267
    %v269 = vpop.f32.mrb[0].mxu0
    %v270 = vadd.f32 %v81, %v269
    %v271 = vpop.f32.mrb[0].mxu0
    %v272 = vadd.f32 %v77, %v271
    %v273 = vpop.f32.mrb[0].mxu0
    %v274 = vadd.f32 %v81, %v273
    %275 = vmatprep.mubr.bf16.mxu0 0
    %276 = vmatmul.mubr.bf16.gmra.mrb[0].mxu0 %v154
    %v277 = vpop.f32.mrb[0].mxu0
    %v278 = vadd.f32 %v77, %v277
    %v279 = vpop.f32.mrb[0].mxu0
    %v280 = vadd.f32 %v81, %v279
    %v281 = vpop.f32.mrb[0].mxu0
    %v282 = vadd.f32 %v77, %v281
    %v283 = vpop.f32.mrb[0].mxu0
    %v284 = vadd.f32 %v81, %v283
    %285 = vmatprep.mubr.bf16.mxu0 0
    %286 = vmatmul.mubr.bf16.gmra.mrb[0].mxu0 %v157
    %v287 = vpop.f32.mrb[0].mxu0
    %v288 = vadd.f32 %v77, %v287
    %v289 = vpop.f32.mrb[0].mxu0
    %v290 = vadd.f32 %v81, %v289
    %v291 = vpop.f32.mrb[0].mxu0
    %v292 = vadd.f32 %v77, %v291
    %v293 = vpop.f32.mrb[0].mxu0
    %v294 = vadd.f32 %v81, %v293
    %295 = vmatprep.mubr.bf16.mxu0 0
    %296 = vmatmul.mubr.bf16.gmra.mrb[0].mxu0 %v160
    %v297 = vpop.f32.mrb[0].mxu0
    %v298 = vadd.f32 %v77, %v297
    %v299 = vpop.f32.mrb[0].mxu0
    %v300 = vadd.f32 %v81, %v299
    %v301 = vpop.f32.mrb[0].mxu0
    %v302 = vadd.f32 %v77, %v301
    %v303 = vpop.f32.mrb[0].mxu0
    %v304 = vadd.f32 %v81, %v303
    %305 = vmatprep.mubr.bf16.mxu0 0
    %306 = vmatmul.mubr.bf16.gmra.mrb[0].mxu0 %v163
    %v307 = vpop.f32.mrb[0].mxu0
    %v308 = vadd.f32 %v77, %v307
    %v309 = vpop.f32.mrb[0].mxu0
    %v310 = vadd.f32 %v81, %v309
    %v311 = vpop.f32.mrb[0].mxu0
    %v312 = vadd.f32 %v77, %v311
    %v313 = vpop.f32.mrb[0].mxu0
    %v314 = vadd.f32 %v81, %v313
    %315 = vmatprep.mubr.bf16.mxu0 0
    %316 = vmatmul.mubr.bf16.gmra.mrb[0].mxu0 %v166
    %v317 = vpop.f32.mrb[0].mxu0
    %v318 = vadd.f32 %v77, %v317
    %v319 = vpop.f32.mrb[0].mxu0
    %v320 = vadd.f32 %v81, %v319
    %v321 = vpop.f32.mrb[0].mxu0
    %v322 = vadd.f32 %v77, %v321
    %v323 = vpop.f32.mrb[0].mxu0
    %v324 = vadd.f32 %v81, %v323
    %325 = vmatprep.mubr.bf16.mxu0 0
    %326 = vmatmul.mubr.bf16.gmra.mrb[0].mxu0 %v169
    %v327 = vpop.f32.mrb[0].mxu0
    %v328 = vadd.f32 %v77, %v327
    %v329 = vpop.f32.mrb[0].mxu0
    %v330 = vadd.f32 %v81, %v329
    %v331 = vpop.f32.mrb[0].mxu0
    %v332 = vadd.f32 %v77, %v331
    %v333 = vpop.f32.mrb[0].mxu0
    %v334 = vadd.f32 %v81, %v333
    %335 = vmatprep.mubr.bf16.mxu0 0
    %336 = vmatmul.mubr.bf16.gmra.mrb[0].mxu0 %v172
    %v337 = vpop.f32.mrb[0].mxu0
    %v338 = vadd.f32 %v77, %v337
    %v339 = vpop.f32.mrb[0].mxu0
    %v340 = vadd.f32 %v81, %v339
    %v341 = vpop.f32.mrb[0].mxu0
    %v342 = vadd.f32 %v77, %v341
    %v343 = vpop.f32.mrb[0].mxu0
    %v344 = vadd.f32 %v81, %v343
    %345 = vmatprep.mubr.bf16.mxu0 0
    %346 = vmatmul.mubr.bf16.gmra.mrb[0].mxu0 %v175
    %v347 = vpop.f32.mrb[0].mxu0
    %v348 = vadd.f32 %v77, %v347
    %v349 = vpop.f32.mrb[0].mxu0
    %v350 = vadd.f32 %v81, %v349
    %v351 = vpop.f32.mrb[0].mxu0
    %v352 = vadd.f32 %v77, %v351
    %v353 = vpop.f32.mrb[0].mxu0
    %v354 = vadd.f32 %v81, %v353
    %355 = vmatprep.mubr.bf16.mxu0 0
    %356 = vmatmul.mubr.bf16.gmra.mrb[0].mxu0 %v178
    %v357 = vpop.f32.mrb[0].mxu0
    %v358 = vadd.f32 %v77, %v357
    %v359 = vpop.f32.mrb[0].mxu0
    %v360 = vadd.f32 %v81, %v359
    %v361 = vpop.f32.mrb[0].mxu0
    %v362 = vadd.f32 %v77, %v361
    %v363 = vpop.f32.mrb[0].mxu0
    %v364 = vadd.f32 %v81, %v363
    %365 = vmatprep.mubr.bf16.mxu0 0
    %366 = vmatmul.mubr.bf16.gmra.mrb[0].mxu0 %v181
    %v367 = vpop.f32.mrb[0].mxu0
    %v368 = vadd.f32 %v77, %v367
    %v369 = vpop.f32.mrb[0].mxu0
    %v370 = vadd.f32 %v81, %v369
    %v371 = vpop.f32.mrb[0].mxu0
    %v372 = vadd.f32 %v77, %v371
    %v373 = vpop.f32.mrb[0].mxu0
    %v374 = vadd.f32 %v81, %v373
    %375 = vdwg.mxu0
    %376 = vmatprep.subr.bf16.mxu0 %v121
    %377 = vmatpush1.bf16.msra.mxu0 %v120
    %378 = vmatprep.subr.bf16.mxu0 %v125
    %379 = vmatpush1.bf16.msra.mxu0 %v124
    %380 = vmatprep.subr.bf16.mxu0 0
    %381 = vmatpush1.bf16.msra.mxu0 0
    %382 = vmatprep.subr.bf16.mxu0 0
    %383 = vmatpush1.bf16.msra.mxu0 0
    %384 = vmatprep.subr.bf16.mxu0 0
    %385 = vmatpush1.bf16.msra.mxu0 0
    %386 = vmatprep.subr.bf16.mxu0 0
    %387 = vmatpush1.bf16.msra.mxu0 0
    %388 = vmatprep.subr.bf16.mxu0 0
    %389 = vmatpush1.bf16.msra.mxu0 0
    %390 = vmatprep.subr.bf16.mxu0 0
    %391 = vmatpush1.bf16.msra.mxu0 0
    %392 = vmatprep.subr.bf16.mxu0 0
    %393 = vmatpush1.bf16.msra.mxu0 0
    %394 = vmatprep.subr.bf16.mxu0 0
    %395 = vmatpush1.bf16.msra.mxu0 0
    %396 = vmatprep.subr.bf16.mxu0 0
    %397 = vmatpush1.bf16.msra.mxu0 0
    %398 = vmatprep.subr.bf16.mxu0 0
    %399 = vmatpush1.bf16.msra.mxu0 0
    %400 = vmatprep.subr.bf16.mxu0 0
    %401 = vmatpush1.bf16.msra.mxu0 0
    %402 = vmatprep.subr.bf16.mxu0 0
    %403 = vmatpush1.bf16.msra.mxu0 0
    %404 = vmatprep.subr.bf16.mxu0 0
    %405 = vmatpush1.bf16.msra.mxu0 0
    %406 = vmatprep.subr.bf16.mxu0 0
    %407 = vmatpush1.bf16.msra.mxu0 0
    %408 = vmatprep.mubr.bf16.mxu0 0
    %409 = vmatmul.mubr.bf16.gmra.mrb[0].mxu0 %v136
    %v410 = vpop.f32.mrb[0].mxu0
    %v411 = vadd.f32 %v85, %v410
    %v412 = vpop.f32.mrb[0].mxu0
    %v413 = vadd.f32 %v89, %v412
    %v414 = vpop.f32.mrb[0].mxu0
    %v415 = vadd.f32 %v85, %v414
    %v416 = vpop.f32.mrb[0].mxu0
    %v417 = vadd.f32 %v89, %v416
    %418 = vmatprep.mubr.bf16.mxu0 0
    %419 = vmatmul.mubr.bf16.gmra.mrb[0].mxu0 %v139
    %v420 = vpop.f32.mrb[0].mxu0
    %v421 = vadd.f32 %v85, %v420
    %v422 = vpop.f32.mrb[0].mxu0
    %v423 = vadd.f32 %v89, %v422
    %v424 = vpop.f32.mrb[0].mxu0
    %v425 = vadd.f32 %v85, %v424
    %v426 = vpop.f32.mrb[0].mxu0
    %v427 = vadd.f32 %v89, %v426
    %428 = vmatprep.mubr.bf16.mxu0 0
    %429 = vmatmul.mubr.bf16.gmra.mrb[0].mxu0 %v142
    %v430 = vpop.f32.mrb[0].mxu0
    %v431 = vadd.f32 %v85, %v430
    %v432 = vpop.f32.mrb[0].mxu0
    %v433 = vadd.f32 %v89, %v432
    %v434 = vpop.f32.mrb[0].mxu0
    %v435 = vadd.f32 %v85, %v434
    %v436 = vpop.f32.mrb[0].mxu0
    %v437 = vadd.f32 %v89, %v436
    %438 = vmatprep.mubr.bf16.mxu0 0
    %439 = vmatmul.mubr.bf16.gmra.mrb[0].mxu0 %v145
    %v440 = vpop.f32.mrb[0].mxu0
    %v441 = vadd.f32 %v85, %v440
    %v442 = vpop.f32.mrb[0].mxu0
    %v443 = vadd.f32 %v89, %v442
    %v444 = vpop.f32.mrb[0].mxu0
    %v445 = vadd.f32 %v85, %v444
    %v446 = vpop.f32.mrb[0].mxu0
    %v447 = vadd.f32 %v89, %v446
    %448 = vmatprep.mubr.bf16.mxu0 0
    %449 = vmatmul.mubr.bf16.gmra.mrb[0].mxu0 %v148
    %v450 = vpop.f32.mrb[0].mxu0
    %v451 = vadd.f32 %v85, %v450
    %v452 = vpop.f32.mrb[0].mxu0
    %v453 = vadd.f32 %v89, %v452
    %v454 = vpop.f32.mrb[0].mxu0
    %v455 = vadd.f32 %v85, %v454
    %v456 = vpop.f32.mrb[0].mxu0
    %v457 = vadd.f32 %v89, %v456
    %458 = vmatprep.mubr.bf16.mxu0 0
    %459 = vmatmul.mubr.bf16.gmra.mrb[0].mxu0 %v151
    %v460 = vpop.f32.mrb[0].mxu0
    %v461 = vadd.f32 %v85, %v460
    %v462 = vpop.f32.mrb[0].mxu0
    %v463 = vadd.f32 %v89, %v462
    %v464 = vpop.f32.mrb[0].mxu0
    %v465 = vadd.f32 %v85, %v464
    %v466 = vpop.f32.mrb[0].mxu0
    %v467 = vadd.f32 %v89, %v466
    %468 = vmatprep.mubr.bf16.mxu0 0
    %469 = vmatmul.mubr.bf16.gmra.mrb[0].mxu0 %v154
    %v470 = vpop.f32.mrb[0].mxu0
    %v471 = vadd.f32 %v85, %v470
    %v472 = vpop.f32.mrb[0].mxu0
    %v473 = vadd.f32 %v89, %v472
    %v474 = vpop.f32.mrb[0].mxu0
    %v475 = vadd.f32 %v85, %v474
    %v476 = vpop.f32.mrb[0].mxu0
    %v477 = vadd.f32 %v89, %v476
    %478 = vmatprep.mubr.bf16.mxu0 0
    %479 = vmatmul.mubr.bf16.gmra.mrb[0].mxu0 %v157
    %v480 = vpop.f32.mrb[0].mxu0
    %v481 = vadd.f32 %v85, %v480
    %v482 = vpop.f32.mrb[0].mxu0
    %v483 = vadd.f32 %v89, %v482
    %v484 = vpop.f32.mrb[0].mxu0
    %v485 = vadd.f32 %v85, %v484
    %v486 = vpop.f32.mrb[0].mxu0
    %v487 = vadd.f32 %v89, %v486
    %488 = vmatprep.mubr.bf16.mxu0 0
    %489 = vmatmul.mubr.bf16.gmra.mrb[0].mxu0 %v160
    %v490 = vpop.f32.mrb[0].mxu0
    %v491 = vadd.f32 %v85, %v490
    %v492 = vpop.f32.mrb[0].mxu0
    %v493 = vadd.f32 %v89, %v492
    %v494 = vpop.f32.mrb[0].mxu0
    %v495 = vadd.f32 %v85, %v494
    %v496 = vpop.f32.mrb[0].mxu0
    %v497 = vadd.f32 %v89, %v496
    %498 = vmatprep.mubr.bf16.mxu0 0
    %499 = vmatmul.mubr.bf16.gmra.mrb[0].mxu0 %v163
    %v500 = vpop.f32.mrb[0].mxu0
    %v501 = vadd.f32 %v85, %v500
    %v502 = vpop.f32.mrb[0].mxu0
    %v503 = vadd.f32 %v89, %v502
    %v504 = vpop.f32.mrb[0].mxu0
    %v505 = vadd.f32 %v85, %v504
    %v506 = vpop.f32.mrb[0].mxu0
    %v507 = vadd.f32 %v89, %v506
    %508 = vmatprep.mubr.bf16.mxu0 0
    %509 = vmatmul.mubr.bf16.gmra.mrb[0].mxu0 %v166
    %v510 = vpop.f32.mrb[0].mxu0
    %v511 = vadd.f32 %v85, %v510
    %v512 = vpop.f32.mrb[0].mxu0
    %v513 = vadd.f32 %v89, %v512
    %v514 = vpop.f32.mrb[0].mxu0
    %v515 = vadd.f32 %v85, %v514
    %v516 = vpop.f32.mrb[0].mxu0
    %v517 = vadd.f32 %v89, %v516
    %518 = vmatprep.mubr.bf16.mxu0 0
    %519 = vmatmul.mubr.bf16.gmra.mrb[0].mxu0 %v169
    %v520 = vpop.f32.mrb[0].mxu0
    %v521 = vadd.f32 %v85, %v520
    %v522 = vpop.f32.mrb[0].mxu0
    %v523 = vadd.f32 %v89, %v522
    %v524 = vpop.f32.mrb[0].mxu0
    %v525 = vadd.f32 %v85, %v524
    %v526 = vpop.f32.mrb[0].mxu0
    %v527 = vadd.f32 %v89, %v526
    %528 = vmatprep.mubr.bf16.mxu0 0
    %529 = vmatmul.mubr.bf16.gmra.mrb[0].mxu0 %v172
    %v530 = vpop.f32.mrb[0].mxu0
    %v531 = vadd.f32 %v85, %v530
    %v532 = vpop.f32.mrb[0].mxu0
    %v533 = vadd.f32 %v89, %v532
    %v534 = vpop.f32.mrb[0].mxu0
    %v535 = vadd.f32 %v85, %v534
    %v536 = vpop.f32.mrb[0].mxu0
    %v537 = vadd.f32 %v89, %v536
    %538 = vmatprep.mubr.bf16.mxu0 0
    %539 = vmatmul.mubr.bf16.gmra.mrb[0].mxu0 %v175
    %v540 = vpop.f32.mrb[0].mxu0
    %v541 = vadd.f32 %v85, %v540
    %v542 = vpop.f32.mrb[0].mxu0
    %v543 = vadd.f32 %v89, %v542
    %v544 = vpop.f32.mrb[0].mxu0
    %v545 = vadd.f32 %v85, %v544
    %v546 = vpop.f32.mrb[0].mxu0
    %v547 = vadd.f32 %v89, %v546
    %548 = vmatprep.mubr.bf16.mxu0 0
    %549 = vmatmul.mubr.bf16.gmra.mrb[0].mxu0 %v178
    %v550 = vpop.f32.mrb[0].mxu0
    %v551 = vadd.f32 %v85, %v550
    %v552 = vpop.f32.mrb[0].mxu0
    %v553 = vadd.f32 %v89, %v552
    %v554 = vpop.f32.mrb[0].mxu0
    %v555 = vadd.f32 %v85, %v554
    %v556 = vpop.f32.mrb[0].mxu0
    %v557 = vadd.f32 %v89, %v556
    %558 = vmatprep.mubr.bf16.mxu0 0
    %559 = vmatmul.mubr.bf16.gmra.mrb[0].mxu0 %v181
    %v560 = vpop.f32.mrb[0].mxu0
    %v561 = vadd.f32 %v85, %v560
    %v562 = vpop.f32.mrb[0].mxu0
    %v563 = vadd.f32 %v89, %v562
    %v564 = vpop.f32.mrb[0].mxu0
    %v565 = vadd.f32 %v85, %v564
    %v566 = vpop.f32.mrb[0].mxu0
    %v567 = vadd.f32 %v89, %v566
    %568 = vdwg.mxu0
    %v569 = vpack.c.bf16 %v222, %v218
    %v570 = vpack.c.bf16 %v224, %v220
    %v571 = vpack.c.bf16 %v415, %v411
    %v572 = vpack.c.bf16 %v417, %v413
    %v573 = vpack.c.bf16 %v232, %v228
    %v574 = vpack.c.bf16 %v234, %v230
    %v575 = vpack.c.bf16 %v425, %v421
    %v576 = vpack.c.bf16 %v427, %v423
    %v577 = vpack.c.bf16 %v242, %v238
    %v578 = vpack.c.bf16 %v244, %v240
    %v579 = vpack.c.bf16 %v435, %v431
    %v580 = vpack.c.bf16 %v437, %v433
    %v581 = vpack.c.bf16 %v252, %v248
    %v582 = vpack.c.bf16 %v254, %v250
    %v583 = vpack.c.bf16 %v445, %v441
    %v584 = vpack.c.bf16 %v447, %v443
    %v585 = vpack.c.bf16 %v262, %v258
    %v586 = vpack.c.bf16 %v264, %v260
    %v587 = vpack.c.bf16 %v455, %v451
    %v588 = vpack.c.bf16 %v457, %v453
    %v589 = vpack.c.bf16 %v272, %v268
    %v590 = vpack.c.bf16 %v274, %v270
    %v591 = vpack.c.bf16 %v465, %v461
    %v592 = vpack.c.bf16 %v467, %v463
    %v593 = vpack.c.bf16 %v282, %v278
    %v594 = vpack.c.bf16 %v284, %v280
    %v595 = vpack.c.bf16 %v475, %v471
    %v596 = vpack.c.bf16 %v477, %v473
    %v597 = vpack.c.bf16 %v292, %v288
    %v598 = vpack.c.bf16 %v294, %v290
    %v599 = vpack.c.bf16 %v485, %v481
    %v600 = vpack.c.bf16 %v487, %v483
    %v601 = vpack.c.bf16 %v302, %v298
    %v602 = vpack.c.bf16 %v304, %v300
    %v603 = vpack.c.bf16 %v495, %v491
    %v604 = vpack.c.bf16 %v497, %v493
    %v605 = vpack.c.bf16 %v312, %v308
    %v606 = vpack.c.bf16 %v314, %v310
    %v607 = vpack.c.bf16 %v505, %v501
    %v608 = vpack.c.bf16 %v507, %v503
    %v609 = vpack.c.bf16 %v322, %v318
    %v610 = vpack.c.bf16 %v324, %v320
    %v611 = vpack.c.bf16 %v515, %v511
    %v612 = vpack.c.bf16 %v517, %v513
    %v613 = vpack.c.bf16 %v332, %v328
    %v614 = vpack.c.bf16 %v334, %v330
    %v615 = vpack.c.bf16 %v525, %v521
    %v616 = vpack.c.bf16 %v527, %v523
    %v617 = vpack.c.bf16 %v342, %v338
    %v618 = vpack.c.bf16 %v344, %v340
    %v619 = vpack.c.bf16 %v535, %v531
    %v620 = vpack.c.bf16 %v537, %v533
    %v621 = vpack.c.bf16 %v352, %v348
    %v622 = vpack.c.bf16 %v354, %v350
    %v623 = vpack.c.bf16 %v545, %v541
    %v624 = vpack.c.bf16 %v547, %v543
    %v625 = vpack.c.bf16 %v362, %v358
    %v626 = vpack.c.bf16 %v364, %v360
    %v627 = vpack.c.bf16 %v555, %v551
    %v628 = vpack.c.bf16 %v557, %v553
    %v629 = vpack.c.bf16 %v372, %v368
    %v630 = vpack.c.bf16 %v374, %v370
    %v631 = vpack.c.bf16 %v565, %v561
    %v632 = vpack.c.bf16 %v567, %v563
    %v697 = vunpack.c.l.b16 %v569
    %v698 = vunpack.c.l.b16 %v570
    %v699 = vunpack.c.l.b16 %v571
    %v700 = vunpack.c.l.b16 %v572
    %v701 = vunpack.c.h.b16 %v569
    %v702 = vunpack.c.h.b16 %v570
    %v703 = vunpack.c.h.b16 %v571
    %v704 = vunpack.c.h.b16 %v572
    %v705 = vunpack.c.l.b16 %v573
    %v706 = vunpack.c.l.b16 %v574
    %v707 = vunpack.c.l.b16 %v575
    %v708 = vunpack.c.l.b16 %v576
    %v709 = vunpack.c.h.b16 %v573
    %v710 = vunpack.c.h.b16 %v574
    %v711 = vunpack.c.h.b16 %v575
    %v712 = vunpack.c.h.b16 %v576
    %v713 = vunpack.c.l.b16 %v577
    %v714 = vunpack.c.l.b16 %v578
    %v715 = vunpack.c.l.b16 %v579
    %v716 = vunpack.c.l.b16 %v580
    %v717 = vunpack.c.h.b16 %v577
    %v718 = vunpack.c.h.b16 %v578
    %v719 = vunpack.c.h.b16 %v579
    %v720 = vunpack.c.h.b16 %v580
    %v721 = vunpack.c.l.b16 %v581
    %v722 = vunpack.c.l.b16 %v582
    %v723 = vunpack.c.l.b16 %v583
    %v724 = vunpack.c.l.b16 %v584
    %v725 = vunpack.c.h.b16 %v581
    %v726 = vunpack.c.h.b16 %v582
    %v727 = vunpack.c.h.b16 %v583
    %v728 = vunpack.c.h.b16 %v584
    %v729 = vunpack.c.l.b16 %v585
    %v730 = vunpack.c.l.b16 %v586
    %v731 = vunpack.c.l.b16 %v587
    %v732 = vunpack.c.l.b16 %v588
    %v733 = vunpack.c.h.b16 %v585
    %v734 = vunpack.c.h.b16 %v586
    %v735 = vunpack.c.h.b16 %v587
    %v736 = vunpack.c.h.b16 %v588
    %v737 = vunpack.c.l.b16 %v589
    %v738 = vunpack.c.l.b16 %v590
    %v739 = vunpack.c.l.b16 %v591
    %v740 = vunpack.c.l.b16 %v592
    %v741 = vunpack.c.h.b16 %v589
    %v742 = vunpack.c.h.b16 %v590
    %v743 = vunpack.c.h.b16 %v591
    %v744 = vunpack.c.h.b16 %v592
    %v745 = vunpack.c.l.b16 %v593
    %v746 = vunpack.c.l.b16 %v594
    %v747 = vunpack.c.l.b16 %v595
    %v748 = vunpack.c.l.b16 %v596
    %v749 = vunpack.c.h.b16 %v593
    %v750 = vunpack.c.h.b16 %v594
    %v751 = vunpack.c.h.b16 %v595
    %v752 = vunpack.c.h.b16 %v596
    %v753 = vunpack.c.l.b16 %v597
    %v754 = vunpack.c.l.b16 %v598
    %v755 = vunpack.c.l.b16 %v599
    %v756 = vunpack.c.l.b16 %v600
    %v757 = vunpack.c.h.b16 %v597
    %v758 = vunpack.c.h.b16 %v598
    %v759 = vunpack.c.h.b16 %v599
    %v760 = vunpack.c.h.b16 %v600
    %v761 = vunpack.c.l.b16 %v601
    %v762 = vunpack.c.l.b16 %v602
    %v763 = vunpack.c.l.b16 %v603
    %v764 = vunpack.c.l.b16 %v604
    %v765 = vunpack.c.h.b16 %v601
    %v766 = vunpack.c.h.b16 %v602
    %v767 = vunpack.c.h.b16 %v603
    %v768 = vunpack.c.h.b16 %v604
    %v769 = vunpack.c.l.b16 %v605
    %v770 = vunpack.c.l.b16 %v606
    %v771 = vunpack.c.l.b16 %v607
    %v772 = vunpack.c.l.b16 %v608
    %v773 = vunpack.c.h.b16 %v605
    %v774 = vunpack.c.h.b16 %v606
    %v775 = vunpack.c.h.b16 %v607
    %v776 = vunpack.c.h.b16 %v608
    %v777 = vunpack.c.l.b16 %v609
    %v778 = vunpack.c.l.b16 %v610
    %v779 = vunpack.c.l.b16 %v611
    %v780 = vunpack.c.l.b16 %v612
    %v781 = vunpack.c.h.b16 %v609
    %v782 = vunpack.c.h.b16 %v610
    %v783 = vunpack.c.h.b16 %v611
    %v784 = vunpack.c.h.b16 %v612
    %v785 = vunpack.c.l.b16 %v613
    %v786 = vunpack.c.l.b16 %v614
    %v787 = vunpack.c.l.b16 %v615
    %v788 = vunpack.c.l.b16 %v616
    %v789 = vunpack.c.h.b16 %v613
    %v790 = vunpack.c.h.b16 %v614
    %v791 = vunpack.c.h.b16 %v615
    %v792 = vunpack.c.h.b16 %v616
    %v793 = vunpack.c.l.b16 %v617
    %v794 = vunpack.c.l.b16 %v618
    %v795 = vunpack.c.l.b16 %v619
    %v796 = vunpack.c.l.b16 %v620
    %v797 = vunpack.c.h.b16 %v617
    %v798 = vunpack.c.h.b16 %v618
    %v799 = vunpack.c.h.b16 %v619
    %v800 = vunpack.c.h.b16 %v620
    %v801 = vunpack.c.l.b16 %v621
    %v802 = vunpack.c.l.b16 %v622
    %v803 = vunpack.c.l.b16 %v623
    %v804 = vunpack.c.l.b16 %v624
    %v805 = vunpack.c.h.b16 %v621
    %v806 = vunpack.c.h.b16 %v622
    %v807 = vunpack.c.h.b16 %v623
    %v808 = vunpack.c.h.b16 %v624
    %v809 = vunpack.c.l.b16 %v625
    %v810 = vunpack.c.l.b16 %v626
    %v811 = vunpack.c.l.b16 %v627
    %v812 = vunpack.c.l.b16 %v628
    %v813 = vunpack.c.h.b16 %v625
    %v814 = vunpack.c.h.b16 %v626
    %v815 = vunpack.c.h.b16 %v627
    %v816 = vunpack.c.h.b16 %v628
    %v817 = vunpack.c.l.b16 %v629
    %v818 = vunpack.c.l.b16 %v630
    %v819 = vunpack.c.l.b16 %v631
    %v820 = vunpack.c.l.b16 %v632
    %v821 = vunpack.c.h.b16 %v629
    %v822 = vunpack.c.h.b16 %v630
    %v823 = vunpack.c.h.b16 %v631
    %v824 = vunpack.c.h.b16 %v632
    %v825 = vpack.c.b16 %v698, %v697
    %v826 = vpack.c.b16 %v700, %v699
    %v827 = vpack.c.b16 %v702, %v701
    %v828 = vpack.c.b16 %v704, %v703
    %v829 = vpack.c.b16 %v706, %v705
    %v830 = vpack.c.b16 %v708, %v707
    %v831 = vpack.c.b16 %v710, %v709
    %v832 = vpack.c.b16 %v712, %v711
    %v833 = vpack.c.b16 %v714, %v713
    %v834 = vpack.c.b16 %v716, %v715
    %v835 = vpack.c.b16 %v718, %v717
    %v836 = vpack.c.b16 %v720, %v719
    %v837 = vpack.c.b16 %v722, %v721
    %v838 = vpack.c.b16 %v724, %v723
    %v839 = vpack.c.b16 %v726, %v725
    %v840 = vpack.c.b16 %v728, %v727
    %v841 = vpack.c.b16 %v730, %v729
    %v842 = vpack.c.b16 %v732, %v731
    %v843 = vpack.c.b16 %v734, %v733
    %v844 = vpack.c.b16 %v736, %v735
    %v845 = vpack.c.b16 %v738, %v737
    %v846 = vpack.c.b16 %v740, %v739
    %v847 = vpack.c.b16 %v742, %v741
    %v848 = vpack.c.b16 %v744, %v743
    %v849 = vpack.c.b16 %v746, %v745
    %v850 = vpack.c.b16 %v748, %v747
    %v851 = vpack.c.b16 %v750, %v749
    %v852 = vpack.c.b16 %v752, %v751
    %v853 = vpack.c.b16 %v754, %v753
    %v854 = vpack.c.b16 %v756, %v755
    %v855 = vpack.c.b16 %v758, %v757
    %v856 = vpack.c.b16 %v760, %v759
    %v857 = vpack.c.b16 %v762, %v761
    %v858 = vpack.c.b16 %v764, %v763
    %v859 = vpack.c.b16 %v766, %v765
    %v860 = vpack.c.b16 %v768, %v767
    %v861 = vpack.c.b16 %v770, %v769
    %v862 = vpack.c.b16 %v772, %v771
    %v863 = vpack.c.b16 %v774, %v773
    %v864 = vpack.c.b16 %v776, %v775
    %v865 = vpack.c.b16 %v778, %v777
    %v866 = vpack.c.b16 %v780, %v779
    %v867 = vpack.c.b16 %v782, %v781
    %v868 = vpack.c.b16 %v784, %v783
    %v869 = vpack.c.b16 %v786, %v785
    %v870 = vpack.c.b16 %v788, %v787
    %v871 = vpack.c.b16 %v790, %v789
    %v872 = vpack.c.b16 %v792, %v791
    %v873 = vpack.c.b16 %v794, %v793
    %v874 = vpack.c.b16 %v796, %v795
    %v875 = vpack.c.b16 %v798, %v797
    %v876 = vpack.c.b16 %v800, %v799
    %v877 = vpack.c.b16 %v802, %v801
    %v878 = vpack.c.b16 %v804, %v803
    %v879 = vpack.c.b16 %v806, %v805
    %v880 = vpack.c.b16 %v808, %v807
    %v881 = vpack.c.b16 %v810, %v809
    %v882 = vpack.c.b16 %v812, %v811
    %v883 = vpack.c.b16 %v814, %v813
    %v884 = vpack.c.b16 %v816, %v815
    %v885 = vpack.c.b16 %v818, %v817
    %v886 = vpack.c.b16 %v820, %v819
    %v887 = vpack.c.b16 %v822, %v821
    %v888 = vpack.c.b16 %v824, %v823
    %953 = vst [vmem:[#allocation2] sm:$0xff] %v825
    %954 = vst [vmem:[#allocation2 + $0x8] sm:$0xff] %v826
    %955 = vst [vmem:[#allocation2 + $0x10] sm:$0xff] %v827
    %956 = vst [vmem:[#allocation2 + $0x18] sm:$0xff] %v828
    %957 = vst [vmem:[#allocation2 + $0x20] sm:$0xff] %v829
    %958 = vst [vmem:[#allocation2 + $0x28] sm:$0xff] %v830
    %959 = vst [vmem:[#allocation2 + $0x30] sm:$0xff] %v831
    %960 = vst [vmem:[#allocation2 + $0x38] sm:$0xff] %v832
    %961 = vst [vmem:[#allocation2 + $0x40] sm:$0xff] %v833
    %962 = vst [vmem:[#allocation2 + $0x48] sm:$0xff] %v834
    %963 = vst [vmem:[#allocation2 + $0x50] sm:$0xff] %v835
    %964 = vst [vmem:[#allocation2 + $0x58] sm:$0xff] %v836
    %965 = vst [vmem:[#allocation2 + $0x60] sm:$0xff] %v837
    %966 = vst [vmem:[#allocation2 + $0x68] sm:$0xff] %v838
    %967 = vst [vmem:[#allocation2 + $0x70] sm:$0xff] %v839
    %968 = vst [vmem:[#allocation2 + $0x78] sm:$0xff] %v840
    %969 = vst [vmem:[#allocation2 + $0x80] sm:$0xff] %v841
    %970 = vst [vmem:[#allocation2 + $0x88] sm:$0xff] %v842
    %971 = vst [vmem:[#allocation2 + $0x90] sm:$0xff] %v843
    %972 = vst [vmem:[#allocation2 + $0x98] sm:$0xff] %v844
    %973 = vst [vmem:[#allocation2 + $0xa0] sm:$0xff] %v845
    %974 = vst [vmem:[#allocation2 + $0xa8] sm:$0xff] %v846
    %975 = vst [vmem:[#allocation2 + $0xb0] sm:$0xff] %v847
    %976 = vst [vmem:[#allocation2 + $0xb8] sm:$0xff] %v848
    %977 = vst [vmem:[#allocation2 + $0xc0] sm:$0xff] %v849
    %978 = vst [vmem:[#allocation2 + $0xc8] sm:$0xff] %v850
    %979 = vst [vmem:[#allocation2 + $0xd0] sm:$0xff] %v851
    %980 = vst [vmem:[#allocation2 + $0xd8] sm:$0xff] %v852
    %981 = vst [vmem:[#allocation2 + $0xe0] sm:$0xff] %v853
    %982 = vst [vmem:[#allocation2 + $0xe8] sm:$0xff] %v854
    %983 = vst [vmem:[#allocation2 + $0xf0] sm:$0xff] %v855
    %984 = vst [vmem:[#allocation2 + $0xf8] sm:$0xff] %v856
    %985 = vst [vmem:[#allocation2 + $0x100] sm:$0xff] %v857
    %986 = vst [vmem:[#allocation2 + $0x108] sm:$0xff] %v858
    %987 = vst [vmem:[#allocation2 + $0x110] sm:$0xff] %v859
    %988 = vst [vmem:[#allocation2 + $0x118] sm:$0xff] %v860
    %989 = vst [vmem:[#allocation2 + $0x120] sm:$0xff] %v861
    %990 = vst [vmem:[#allocation2 + $0x128] sm:$0xff] %v862
    %991 = vst [vmem:[#allocation2 + $0x130] sm:$0xff] %v863
    %992 = vst [vmem:[#allocation2 + $0x138] sm:$0xff] %v864
    %993 = vst [vmem:[#allocation2 + $0x140] sm:$0xff] %v865
    %994 = vst [vmem:[#allocation2 + $0x148] sm:$0xff] %v866
    %995 = vst [vmem:[#allocation2 + $0x150] sm:$0xff] %v867
    %996 = vst [vmem:[#allocation2 + $0x158] sm:$0xff] %v868
    %997 = vst [vmem:[#allocation2 + $0x160] sm:$0xff] %v869
    %998 = vst [vmem:[#allocation2 + $0x168] sm:$0xff] %v870
    %999 = vst [vmem:[#allocation2 + $0x170] sm:$0xff] %v871
    %1000 = vst [vmem:[#allocation2 + $0x178] sm:$0xff] %v872
    %1001 = vst [vmem:[#allocation2 + $0x180] sm:$0xff] %v873
    %1002 = vst [vmem:[#allocation2 + $0x188] sm:$0xff] %v874
    %1003 = vst [vmem:[#allocation2 + $0x190] sm:$0xff] %v875
    %1004 = vst [vmem:[#allocation2 + $0x198] sm:$0xff] %v876
    %1005 = vst [vmem:[#allocation2 + $0x1a0] sm:$0xff] %v877
    %1006 = vst [vmem:[#allocation2 + $0x1a8] sm:$0xff] %v878
    %1007 = vst [vmem:[#allocation2 + $0x1b0] sm:$0xff] %v879
    %1008 = vst [vmem:[#allocation2 + $0x1b8] sm:$0xff] %v880
    %1009 = vst [vmem:[#allocation2 + $0x1c0] sm:$0xff] %v881
    %1010 = vst [vmem:[#allocation2 + $0x1c8] sm:$0xff] %v882
    %1011 = vst [vmem:[#allocation2 + $0x1d0] sm:$0xff] %v883
    %1012 = vst [vmem:[#allocation2 + $0x1d8] sm:$0xff] %v884
    %1013 = vst [vmem:[#allocation2 + $0x1e0] sm:$0xff] %v885
    %1014 = vst [vmem:[#allocation2 + $0x1e8] sm:$0xff] %v886
    %1015 = vst [vmem:[#allocation2 + $0x1f0] sm:$0xff] %v887
    %1016 = vst [vmem:[#allocation2 + $0x1f8] sm:$0xff] %v888
    // Predicated region
    $region14: #{tpu_custom_call.1} parent=1 // pred_check
      _
    $region15: #{tpu_custom_call.1} parent=1 // pred_check_branch
      %1018 = sbr.rel (0) target = $region17
    $region16: #{tpu_custom_call.1} parent=1 // pred_region
      %s1020 = ssub.s32 8192, 8192
      %1021 = vsyncadd [#allocation3], %s1020
      %s1022 = sshll.u32 [#allocation2], 4
      %s1023 = int_to_ptr.vmem [resolvable:$true] %s1022
      %1028 = dma.vmem_to_hbm [thread:$0]  %s1023, 8192, %s3, [#allocation3], 256, 256, 16
    $region17: #{tpu_custom_call.1} parent=1 // pred_fallthru
      _
    // Predicated region
    $region18: #{tpu_custom_call.1} parent=1 // pred_check
      _
    $region19: #{tpu_custom_call.1} parent=1 // pred_check_branch
      %1030 = sbr.rel (0) target = $region21
    $region20: #{tpu_custom_call.1} parent=1 // pred_region
      %1031 = dma.done [#allocation3], 8192
    $region21: #{tpu_custom_call.1} parent=1 // pred_fallthru
      _
    %1032 = vsyncpa [#allocation3], 1

</llo_original>
